<compile_context>
chip_gen: v5e
topology: v5e:2x2
jax: 0.10.0
libtpu: 0.0.40
codegen_flags: <defaults>
</compile_context>

<pallas_src>
import functools

import jax
import jax.numpy as jnp
from jax import lax
from jax.experimental import pallas as pl
from jax.experimental.pallas import tpu as pltpu

_VMEM_BUDGET = 24 * 1024 * 1024   # pipeline footprint budget, safe on v7x (64 MiB)
_VMEM_LIMIT_CAP = 48 * 1024 * 1024


def _pick_block_k(K, m_pad, itemsize, budget_bytes=_VMEM_BUDGET, cap=4096):
    """Largest lane-dense (multiple of 128) K tile whose double-buffered input
    footprint + resident (M,M) f32 accumulator + target Gram fits the budget."""
    k_ceil = -(-K // 128) * 128
    fixed = 2 * m_pad * m_pad * 4           # f32 accumulator + resident target
    bk = min(cap, k_ceil)
    while True:
        bk = max((bk // 128) * 128, 128)
        if bk == 128 or fixed + 2 * m_pad * bk * itemsize <= budget_bytes:
            return bk
        bk //= 2


def _as_2d(features):
    """Reshape (N,C,H,W) -> (M,K) in native dtype; pad rows to a sublane multiple."""
    N, C, H, W = features.shape
    M, K = N * C, H * W
    f2d = features.reshape(M, K)            # pure view, no dtype cast (perf review)
    m_pad = -(-M // 8) * 8
    if m_pad != M:
        f2d = jnp.pad(f2d, ((0, m_pad - M), (0, 0)))
    return f2d, M, K, m_pad


def _check_m(m_pad):
    if 2 * m_pad * m_pad * 4 > 20 * 1024 * 1024:
        raise NotImplementedError(
            "N*C too large for a VMEM-resident (M,M) Gram accumulator; "
            "needs an M-tiled variant.")


def _accumulate_gram_step(x_ref, acc_ref, *, k_total, block_k):
    """acc += X_k @ X_k^T for the current K tile (masking the ragged tail)."""
    k = pl.program_id(0)
    xk = x_ref[...]                          # (M_pad, block_k), native dtype
    if k_total % block_k != 0:
        # Ragged last block: lanes >= k_total - k*block_k hold unspecified data.
        lane = lax.broadcasted_iota(jnp.int32, xk.shape, 1)
        limit = k_total - k * block_k        # >= block_k on all but the last step
        xk = jnp.where(lane < limit, xk, jnp.zeros_like(xk))
    # Contract the lane axis of both operands; f32 accumulation on the MXU.
    acc_ref[...] += lax.dot_general(
        xk, xk, (((1,), (1,)), ((), ())), preferred_element_type=jnp.float32
    )


# ----------------------------------------------------------------------------
# Gram-matrix kernel (precomputes the target Gram, i.e. the __init__ analogue)
# ----------------------------------------------------------------------------
def _gram_kernel(x_ref, g_ref, acc_ref, *, scale, k_total, block_k):
    k = pl.program_id(0)

    @pl.when(k == 0)
    def _():
        acc_ref[...] = jnp.zeros_like(acc_ref)

    _accumulate_gram_step(x_ref, acc_ref, k_total=k_total, block_k=block_k)

    @pl.when(k == pl.num_programs(0) - 1)
    def _():
        g_ref[...] = (acc_ref[...] * scale).astype(g_ref.dtype)


def calculate_gram(features):
    """G = F F^T / (N*C*H*W) with F = features.reshape(N*C, H*W)."""
    f2d, M, K, m_pad = _as_2d(features)
    _check_m(m_pad)
    itemsize = jnp.dtype(f2d.dtype).itemsize
    block_k = _pick_block_k(K, m_pad, itemsize)
    foot = 2 * m_pad * block_k * itemsize + 2 * m_pad * m_pad * 4
    vmem_limit = int(min(_VMEM_LIMIT_CAP, max(32 * 1024 * 1024, 2 * foot)))

    g = pl.pallas_call(
        functools.partial(_gram_kernel, scale=1.0 / float(M * K),
                          k_total=K, block_k=block_k),
        out_shape=jax.ShapeDtypeStruct((m_pad, m_pad), jnp.float32),
        grid=(pl.cdiv(K, block_k),),
        in_specs=[pl.BlockSpec((m_pad, block_k), lambda k: (0, k))],
        out_specs=pl.BlockSpec((m_pad, m_pad), lambda k: (0, 0)),
        scratch_shapes=[pltpu.VMEM((m_pad, m_pad), jnp.float32)],
        compiler_params=pltpu.CompilerParams(
            dimension_semantics=("arbitrary",),
            vmem_limit_bytes=vmem_limit),
    )(f2d)
    return g[:M, :M] if m_pad != M else g


# ----------------------------------------------------------------------------
# Fused style-loss kernel: Gram(x) + MSE vs. target Gram (the forward pass)
# ----------------------------------------------------------------------------
def _style_loss_kernel(x_ref, tgt_ref, loss_ref, acc_ref, *,
                       gram_scale, mse_scale, k_total, block_k):
    k = pl.program_id(0)

    @pl.when(k == 0)
    def _():
        acc_ref[...] = jnp.zeros_like(acc_ref)

    _accumulate_gram_step(x_ref, acc_ref, k_total=k_total, block_k=block_k)

    @pl.when(k == pl.num_programs(0) - 1)
    def _():
        nrows = acc_ref.shape[0]
        # Chunk the MSE reduction over row blocks for large M so the epilogue
        # stays in-register (avoid spilling hundreds of live vregs).
        chunk = nrows
        if nrows > 256:
            for c in (256, 128, 64, 32, 16, 8):
                if nrows % c == 0:
                    chunk = c
                    break
        if chunk == nrows:
            diff = acc_ref[...] * gram_scale - tgt_ref[...]
            tot = jnp.sum(diff * diff, keepdims=True)          # (1, 1)
        else:
            n_chunks = nrows // chunk

            def body(i, carry):
                r0 = pl.multiple_of(i * chunk, chunk)
                d = (acc_ref[pl.ds(r0, chunk), :] * gram_scale
                     - tgt_ref[pl.ds(r0, chunk), :])
                return carry + jnp.sum(d * d, keepdims=True)

            tot = lax.fori_loop(0, n_chunks, body, jnp.zeros((1, 1), jnp.float32))
        loss_ref[...] = tot * mse_scale


def style_loss_forward(x, target_gram):
    """Returns (x, loss) with loss = mse(calculate_gram(x), target_gram)."""
    f2d, M, K, m_pad = _as_2d(x)
    _check_m(m_pad)
    assert target_gram.shape == (M, M)
    tgt = target_gram.astype(jnp.float32)
    if m_pad != M:
        # Pad target consistently with zeros (zero rows of F -> zero Gram entries).
        tgt = jnp.pad(tgt, ((0, m_pad - M), (0, m_pad - M)))

    itemsize = jnp.dtype(f2d.dtype).itemsize
    block_k = _pick_block_k(K, m_pad, itemsize)
    foot = 2 * m_pad * block_k * itemsize + 2 * m_pad * m_pad * 4
    vmem_limit = int(min(_VMEM_LIMIT_CAP, max(32 * 1024 * 1024, 2 * foot)))

    loss = pl.pallas_call(
        functools.partial(
            _style_loss_kernel,
            gram_scale=1.0 / float(M * K),      # ORIGINAL M, K (padding-safe)
            mse_scale=1.0 / float(M * M),
            k_total=K, block_k=block_k),
        out_shape=jax.ShapeDtypeStruct((1, 1), jnp.float32),
        grid=(pl.cdiv(K, block_k),),
        in_specs=[
            pl.BlockSpec((m_pad, block_k), lambda k: (0, k)),
            pl.BlockSpec((m_pad, m_pad), lambda k: (0, 0)),
        ],
        out_specs=pl.BlockSpec((1, 1), lambda k: (0, 0)),
        scratch_shapes=[pltpu.VMEM((m_pad, m_pad), jnp.float32)],
        compiler_params=pltpu.CompilerParams(
            dimension_semantics=("arbitrary",),
            vmem_limit_bytes=vmem_limit),
    )(f2d, tgt)
    # forward() returns the input unchanged; loss is returned explicitly
    # (PyTorch stores it as module state).
    return x, loss[0, 0]


if __name__ == "__main__":
    key = jax.random.PRNGKey(0)
    kx, kt = jax.random.split(key)

    N, C, H, W = 2, 4, 16, 16
    # bf16 features: the kernel streams the native dtype (no wrapper upcast).
    x = jax.random.normal(kx, (N, C, H, W), dtype=jnp.bfloat16)
    target_features = jax.random.normal(kt, (N, C, H, W), dtype=jnp.bfloat16)

    # __init__ analogue: precompute the (detached) target Gram with Pallas.
    target_gram = jax.block_until_ready(calculate_gram(target_features))

    # forward analogue.
    y, loss = style_loss_forward(x, target_gram)
    y = jax.block_until_ready(y)
    loss = jax.block_until_ready(loss)

    # Pure-JAX reference (same bf16 operands, f32 accumulation).
    def gram_ref(f):
        n, c, h, w = f.shape
        m2 = f.reshape(n * c, h * w)
        g = jnp.matmul(m2, m2.T, preferred_element_type=jnp.float32)
        return g / float(n * c * h * w)

    ref_tgt = gram_ref(target_features)
    ref_loss = jnp.mean((gram_ref(x) - ref_tgt) ** 2)

    assert y.shape == x.shape and y.dtype == x.dtype
    assert jnp.array_equal(y, x)                      # pass-through semantics
    assert jnp.allclose(target_gram, ref_tgt, atol=1e-5, rtol=5e-3)
    assert jnp.allclose(loss, ref_loss, atol=1e-6, rtol=5e-3)

    print("KERNEL_OK")
</pallas_src>

<mosaic_0001>
module attributes {stable_mosaic.version = 11 : i64} {
  func.func @_gram_kernel(%arg0: i32, %arg1: memref<8x256xbf16, #tpu.memory_space<vmem>>, %arg2: memref<8x8xf32, #tpu.memory_space<vmem>>, %arg3: memref<8x8xf32, #tpu.memory_space<vmem>>) attributes {dimension_semantics = [#tpu.dimension_semantics<arbitrary>], iteration_bounds = array<i64: 1>, scalar_prefetch = 0 : i64, scratch_operands = 1 : i64, tpu.core_type = #tpu.core_type<tc>, window_params = [{transform_indices = @transform_0, window_bounds = array<i64: 8, 256>}, {pipeline_mode = #tpu.pipeline_mode<synchronous>, transform_indices = @transform_1, window_bounds = array<i64: 8, 8>}]} {
    %c0_i32 = arith.constant 0 : i32
    %0 = arith.cmpi eq, %arg0, %c0_i32 : i32
    %1 = arith.extui %0 : i1 to i32
    %c0_i32_0 = arith.constant 0 : i32
    %2 = arith.cmpi ne, %1, %c0_i32_0 : i32
    scf.if %2 {
      %cst_8 = arith.constant 0.000000e+00 : f32
      %11 = vector.broadcast %cst_8 : f32 to vector<8x8xf32>
      %c0_9 = arith.constant 0 : index
      %c0_10 = arith.constant 0 : index
      %12 = vector.load %arg3[%c0_9, %c0_10] : memref<8x8xf32, #tpu.memory_space<vmem>>, vector<8x8xf32>
      tpu.vector_store %arg3[%c0_9, %c0_10], %11 {strides = array<i32>} : memref<8x8xf32, #tpu.memory_space<vmem>>, vector<8x8xf32>,
    } else {
    }
    %c0 = arith.constant 0 : index
    %c0_1 = arith.constant 0 : index
    %3 = vector.load %arg1[%c0, %c0_1] : memref<8x256xbf16, #tpu.memory_space<vmem>>, vector<8x256xbf16>
    %c0_2 = arith.constant 0 : index
    %c0_3 = arith.constant 0 : index
    %4 = vector.load %arg3[%c0_2, %c0_3] : memref<8x8xf32, #tpu.memory_space<vmem>>, vector<8x8xf32>
    %cst = arith.constant dense<0.000000e+00> : vector<8x8xf32>
    %5 = tpu.matmul %3, %3, %cst {dimension_numbers = #tpu.dot_dimension_numbers<[1], [1], [0], [0], [0, 0, 1, 0], [], []>} : vector<8x256xbf16>, vector<8x256xbf16>, vector<8x8xf32> -> vector<8x8xf32>
    %6 = arith.addf %4, %5 : vector<8x8xf32>
    %c0_4 = arith.constant 0 : index
    %c0_5 = arith.constant 0 : index
    %7 = vector.load %arg3[%c0_4, %c0_5] : memref<8x8xf32, #tpu.memory_space<vmem>>, vector<8x8xf32>
    tpu.vector_store %arg3[%c0_4, %c0_5], %6 {strides = array<i32>} : memref<8x8xf32, #tpu.memory_space<vmem>>, vector<8x8xf32>,
    %c0_i32_6 = arith.constant 0 : i32
    %8 = arith.cmpi eq, %arg0, %c0_i32_6 : i32
    %9 = arith.extui %8 : i1 to i32
    %c0_i32_7 = arith.constant 0 : i32
    %10 = arith.cmpi ne, %9, %c0_i32_7 : i32
    scf.if %10 {
      %c0_8 = arith.constant 0 : index
      %c0_9 = arith.constant 0 : index
      %11 = vector.load %arg3[%c0_8, %c0_9] : memref<8x8xf32, #tpu.memory_space<vmem>>, vector<8x8xf32>
      %cst_10 = arith.constant 4.8828125E-4 : f32
      %12 = vector.broadcast %cst_10 : f32 to vector<8x8xf32>
      %13 = arith.mulf %11, %12 : vector<8x8xf32>
      %c0_11 = arith.constant 0 : index
      %c0_12 = arith.constant 0 : index
      %14 = vector.load %arg2[%c0_11, %c0_12] : memref<8x8xf32, #tpu.memory_space<vmem>>, vector<8x8xf32>
      tpu.vector_store %arg2[%c0_11, %c0_12], %13 {strides = array<i32>} : memref<8x8xf32, #tpu.memory_space<vmem>>, vector<8x8xf32>,
    } else {
    }
    return
  }
  func.func @transform_0(%arg0: i32) -> (i32, i32) {
    %c0_i32 = arith.constant 0 : i32
    %c0_i32_0 = arith.constant 0 : i32
    return %c0_i32, %arg0 : i32, i32
  }
  func.func @transform_1(%arg0: i32) -> (i32, i32) {
    %c0_i32 = arith.constant 0 : i32
    %c0_i32_0 = arith.constant 0 : i32
    %c0_i32_1 = arith.constant 0 : i32
    return %c0_i32, %c0_i32_0 : i32, i32
  }
}

</mosaic_0001>

<llo_original>
// kernel: tpu_custom_call.1
$region0: #{tpu_custom_call.1}
  #allocation0 [shape = 'u32[]', space=smem, size = 0x4, offset = 0x4, fixed_abs, tag = 'smem constant byte address 0x4 - core index']
  #allocation1 [shape = 'u32[72,128]{1,0:T(1,128)}', space=vmem, size = 0x9000, scoped, tag = 'internal scratch']
  #allocation2 [shape = 'f32[8,8]{1,0:T(8,128)}', space=vmem, size = 0x1000, scoped, tag = 'scratch operand']
  %s0 = inlined_call_operand.hbm [shape: bf16[8,256], index: 0, kind: input, shape index: {}]
  %s1 = inlined_call_operand.hbm [shape: f32[8,8], index: 1, kind: output, shape index: {}]
  %s2 = sld [smem:[#allocation0]]
  $region26: #{tpu_custom_call.1} parent=0
    _
  %s4 = ssub.s32 1, %s2
  %s5 = scalar_select 0, %s4, %s2
  $region1: #{tpu_custom_call.1} parent=0
    #allocation3 [shape = 'u8[4096]{0}', space=vmem, size = 0x1000, scoped, tag = 'input window, operand 0, single buffered']
    #allocation4 [shape = 's32[1]{0}', space=sflag, size = 0x4, scoped, tag = 'scoped memory for tpu_custom_call.1']
    #allocation5 [shape = 's32[1]{0}', space=sflag, size = 0x4, scoped, tag = 'scoped memory for tpu_custom_call.1']
    #allocation6 [shape = 'u8[4096]{0}', space=vmem, size = 0x1000, scoped, tag = 'output window, operand 0, single buffered']
    %6 = vsyncpa [#allocation4], 0
    %7 = vsyncpa [#allocation5], 0
    // Predicated region
    $region2: #{tpu_custom_call.1} parent=1 // pred_check
      _
    $region3: #{tpu_custom_call.1} parent=1 // pred_check_branch
      %9 = sbr.rel (0) target = $region5
    $region4: #{tpu_custom_call.1} parent=1 // pred_region
      %11 = vsyncadd [#allocation4], 0
      %s13 = sshll.u32 %s0, 4
      %s14 = int_to_ptr.hbm [resolvable:$true] %s13
      %s15 = sshll.u32 [#allocation3], 4
      %s16 = int_to_ptr.vmem [resolvable:$true] %s15
      %18 = dma.hbm_to_vmem [thread:$0]  %s14, 128, %s16, [#allocation4]
    $region5: #{tpu_custom_call.1} parent=1 // pred_fallthru
      _
    // Predicated region
    $region6: #{tpu_custom_call.1} parent=1 // pred_check
      _
    $region7: #{tpu_custom_call.1} parent=1 // pred_check_branch
      %20 = sbr.rel (0) target = $region9
    $region8: #{tpu_custom_call.1} parent=1 // pred_region
      %22 = dma.done [#allocation4], 128
    $region9: #{tpu_custom_call.1} parent=1 // pred_fallthru
      _
    %p24 = scmp.eq.s32.totalorder 0, 0
    // Predicated region
    $region10: #{tpu_custom_call.1} parent=1 // pred_check
      %p25 = pneg %p24
    $region11: #{tpu_custom_call.1} parent=1 // pred_check_branch
      %27 = sbr.rel (%p25) target = $region13
    $region12: #{tpu_custom_call.1} parent=1 // pred_region
      %vm28 = vcmask 64512
      %29 = vst.msk [vmem:[#allocation2] sm:$0xff] %vm28, 0.0
    $region13: #{tpu_custom_call.1} parent=1 // pred_fallthru
      _
    %v30 = vld [vmem:[#allocation3] sm:$0xff]
    %v31 = vld [vmem:[#allocation2] sm:$0xff]
    %v33 = vunpack.c.l.b16 %v30
    %v34 = vunpack.c.h.b16 %v30
    %v35 = vpack.c.b16 %v33, %v33
    %v36 = vpack.c.b16 %v34, %v34
    %39 = vmatpush.bf16.xpose.msra.mxu0 0
    %40 = vmatpush.bf16.xpose.msra.mxu0 0
    %41 = vmatpush.bf16.xpose.msra.mxu0 0
    %42 = vmatpush.bf16.xpose.msra.mxu0 0
    %43 = vmatpush.bf16.xpose.msra.mxu0 0
    %44 = vmatpush.bf16.xpose.msra.mxu0 0
    %45 = vmatpush.bf16.xpose.msra.mxu0 0
    %46 = vmatpush.bf16.xpose.msra.mxu0 %v35
    %47 = vmatmul.bf16.gmra.mxu0 %v35
    %v48 = vpop.f32.mrf.mxu0
    %v49 = vadd.f32 0.0, %v48
    %v50 = vpop.f32.mrf.mxu0
    %51 = vdwg.mxu0
    %52 = vmatpush.bf16.xpose.msra.mxu0 0
    %53 = vmatpush.bf16.xpose.msra.mxu0 0
    %54 = vmatpush.bf16.xpose.msra.mxu0 0
    %55 = vmatpush.bf16.xpose.msra.mxu0 0
    %56 = vmatpush.bf16.xpose.msra.mxu0 0
    %57 = vmatpush.bf16.xpose.msra.mxu0 0
    %58 = vmatpush.bf16.xpose.msra.mxu0 0
    %59 = vmatpush.bf16.xpose.msra.mxu0 %v36
    %60 = vmatmul.bf16.gmra.mxu0 %v36
    %v61 = vpop.f32.mrf.mxu0
    %v62 = vadd.f32 %v49, %v61
    %v63 = vpop.f32.mrf.mxu0
    %64 = vdwg.mxu0
    %v65 = vadd.f32 %v31, %v62
    %vm66 = vcmask 64512
    %67 = vst.msk [vmem:[#allocation2] sm:$0xff] %vm66, %v65
    // Predicated region
    $region14: #{tpu_custom_call.1} parent=1 // pred_check
      %p68 = pneg %p24
    $region15: #{tpu_custom_call.1} parent=1 // pred_check_branch
      %70 = sbr.rel (%p68) target = $region17
    $region16: #{tpu_custom_call.1} parent=1 // pred_region
      %v71 = vld [vmem:[#allocation2] sm:$0xff]
      %v72 = vmul.f32 %v71, 0.00048828125
      %73 = vst.msk [vmem:[#allocation6] sm:$0xff] %vm66, %v72
    $region17: #{tpu_custom_call.1} parent=1 // pred_fallthru
      _
    // Predicated region
    $region18: #{tpu_custom_call.1} parent=1 // pred_check
      _
    $region19: #{tpu_custom_call.1} parent=1 // pred_check_branch
      %75 = sbr.rel (0) target = $region21
    $region20: #{tpu_custom_call.1} parent=1 // pred_region
      %77 = vsyncadd [#allocation5], 0
      %s79 = sshll.u32 [#allocation6], 4
      %s80 = int_to_ptr.vmem [resolvable:$true] %s79
      %s81 = sshll.u32 %s1, 4
      %s82 = int_to_ptr.hbm [resolvable:$true] %s81
      %84 = dma.vmem_to_hbm [thread:$0]  %s80, 128, %s82, [#allocation5]
    $region21: #{tpu_custom_call.1} parent=1 // pred_fallthru
      _
    // Predicated region
    $region22: #{tpu_custom_call.1} parent=1 // pred_check
      _
    $region23: #{tpu_custom_call.1} parent=1 // pred_check_branch
      %86 = sbr.rel (0) target = $region25
    $region24: #{tpu_custom_call.1} parent=1 // pred_region
      %88 = dma.done [#allocation5], 128
    $region25: #{tpu_custom_call.1} parent=1 // pred_fallthru
      _
    %89 = vsyncpa [#allocation4], 1
    %90 = vsyncpa [#allocation5], 1

</llo_original>
